<compile_context>
chip_gen: v7x
topology: tpu7x:2x2x1
jax: 0.10.0
libtpu: 0.0.40
codegen_flags: <defaults>
</compile_context>

<pallas_src>
from typing import NamedTuple

import jax
import jax.numpy as jnp
from jax.experimental import pallas as pl
from jax.experimental.pallas import tpu as pltpu


def _round_up(x, m):
    return ((x + m - 1) // m) * m


def _vmem_budget_bytes():
    """~70% of per-core VMEM (leaves headroom for compiler scratch)."""
    try:
        cap = pltpu.get_tpu_info().vmem_capacity_bytes
    except Exception:
        cap = 64 * 1024 * 1024  # conservative (v7x) fallback
    return int(cap * 0.7)


class BinaryLinearWeights(NamedTuple):
    scale: jax.Array   # (1,) f32 — mean(|W|)
    w_t: jax.Array     # (K_p, OUT_p) bf16, exact +/-1 (0 for exact zeros), padded
    in_shape: int
    out_shape: int
    tn: int            # output-column tile (== OUT_p when resident)
    resident: bool     # whole weight resident (single-buffered) vs streamed


def prepare_binary_weight(weight, *, vmem_budget=None):
    """One-time prep (call at init / after each weight update), not per forward."""
    out_shape, in_shape = weight.shape
    if vmem_budget is None:
        vmem_budget = _vmem_budget_bytes()

    w_f32 = weight.astype(jnp.float32)
    scale = jnp.mean(jnp.abs(w_f32)).reshape(1)       # f32 scalar -> SMEM
    w_sign = jnp.sign(w_f32)                          # matches torch.sign (0 -> 0)

    k_p = _round_up(in_shape, 128)
    out_p128 = _round_up(out_shape, 128)

    if k_p * out_p128 * 2 <= vmem_budget // 2:
        # Whole weight resident in VMEM, single-buffered.
        tn, resident = out_p128, True
    else:
        # Stream MXU-friendly column blocks (double-buffered).
        tn = 512
        while tn > 256 and 2 * k_p * tn * 2 > vmem_budget // 2:
            tn //= 2
        tn = min(max(tn, 128), out_p128)
        resident = False

    out_p = _round_up(out_shape, tn)
    # Transposed to (K, N): canonical MXU layout -> no in-kernel transpose.
    w_t = jnp.pad(w_sign.T, ((0, k_p - in_shape), (0, out_p - out_shape))).astype(jnp.bfloat16)
    return BinaryLinearWeights(scale, w_t, in_shape, out_shape, tn, resident)


def _binary_linear_kernel(scale_ref, x_ref, w_ref, o_ref):
    # x_ref: (TM, K_p) f32    w_ref: (K_p, TN) bf16 (+/-1)    o_ref: (TM, TN)
    x_bf = x_ref[...].astype(jnp.bfloat16)          # VPU cast, hides under MXU
    acc = jnp.dot(x_bf, w_ref[...], preferred_element_type=jnp.float32)
    o_ref[...] = (acc * scale_ref[0]).astype(o_ref.dtype)


def binary_linear_forward(x, weight_or_prepared, *, row_tile=512, out_dtype=jnp.float32):
    """y = x @ (mean(|W|) * sign(W)).T ; leading dims of x are preserved."""
    if isinstance(weight_or_prepared, BinaryLinearWeights):
        prepared = weight_or_prepared
    else:
        prepared = prepare_binary_weight(weight_or_prepared)

    scale, w_t = prepared.scale, prepared.w_t
    in_shape, out_shape = prepared.in_shape, prepared.out_shape
    tn, resident = prepared.tn, prepared.resident
    k_p, out_p = w_t.shape
    col_tiles = out_p // tn

    assert x.shape[-1] == in_shape, (x.shape, in_shape)
    lead = x.shape[:-1]
    x2d = jnp.reshape(x, (-1, in_shape)).astype(jnp.float32)
    n = x2d.shape[0]

    # --- VMEM budgeting: weight buffers + double-buffered x / out tiles. ---
    budget = _vmem_budget_bytes()
    w_bufs = 1 if (resident and col_tiles == 1) else 2
    w_vmem = w_bufs * k_p * tn * 2
    out_bytes = jnp.dtype(out_dtype).itemsize

    def _step_bytes(t):
        return 2 * t * k_p * 4 + 2 * t * tn * out_bytes

    tm = min(row_tile, _round_up(n, 16))               # 16-aligned (bf16 sublanes)
    if n >= 32:
        tm = min(tm, max(16, _round_up((n + 1) // 2, 16)))   # >=2 row tiles (megacore)
    while tm > 16 and w_vmem + _step_bytes(tm) > budget:
        tm = max(16, _round_up(tm // 2, 16))

    n_p = _round_up(n, tm)
    row_tiles = n_p // tm
    x_p = jnp.pad(x2d, ((0, n_p - n), (0, k_p - in_shape)))   # f32, no bf16 copy

    cap_guess = int(budget / 0.7)
    need = w_vmem + _step_bytes(tm) + (4 << 20)
    vmem_limit = int(min(max(budget, need), cap_guess - (2 << 20)))

    def _build(single_buffer_weight):
        w_kwargs = {"pipeline_mode": pl.Buffered(1)} if single_buffer_weight else {}
        return pl.pallas_call(
            _binary_linear_kernel,
            out_shape=jax.ShapeDtypeStruct((n_p, out_p), out_dtype),
            grid=(col_tiles, row_tiles),
            in_specs=[
                pl.BlockSpec(memory_space=pltpu.MemorySpace.SMEM),        # scale (1,) f32
                pl.BlockSpec((tm, k_p), lambda j, i: (i, 0)),             # x row tile
                pl.BlockSpec((k_p, tn), lambda j, i: (0, j), **w_kwargs), # weight column tile
            ],
            out_specs=pl.BlockSpec((tm, tn), lambda j, i: (i, j)),
            compiler_params=pltpu.CompilerParams(
                dimension_semantics=("parallel", "parallel"),
                vmem_limit_bytes=vmem_limit,
            ),
        )

    single = resident and col_tiles == 1
    try:
        out = _build(single)(scale, x_p, w_t)
    except Exception:
        if not single:
            raise
        # Fallback if single-buffering of the resident weight is rejected.
        out = _build(False)(scale, x_p, w_t)

    return out[:n, :out_shape].reshape(*lead, out_shape)


def init_binary_linear_params(key, in_shape, out_shape):
    # Matches torch init: (rand(out, in) * 2 - 1) * 0.001  -> uniform [-0.001, 0.001)
    return (jax.random.uniform(key, (out_shape, in_shape), dtype=jnp.float32) * 2.0 - 1.0) * 0.001


if __name__ == "__main__":
    in_shape, out_shape = 256, 16
    key = jax.random.PRNGKey(0)
    k_x, k_w = jax.random.split(key)

    # batch=2, seq=8, hidden=in_shape -> F.linear keeps the leading (2, 8) dims.
    x = jax.random.normal(k_x, (2, 8, in_shape), dtype=jnp.float32)
    weight = init_binary_linear_params(k_w, in_shape, out_shape)

    # Prep once (init / weight-update time), reuse across forwards.
    prepared = prepare_binary_weight(weight)

    y = jax.block_until_ready(binary_linear_forward(x, prepared))
    assert y.shape == (2, 8, out_shape), y.shape

    # References.
    scale = jnp.mean(jnp.abs(weight))
    w_sign = jnp.sign(weight)
    x2d = x.reshape(-1, in_shape)
    # (a) same math as the kernel (bf16 x operand, f32 accumulation) -> tight check
    ref_bf16 = (scale * (x2d.astype(jnp.bfloat16).astype(jnp.float32)
                         @ w_sign.astype(jnp.bfloat16).astype(jnp.float32).T)
                ).reshape(2, 8, out_shape)
    # (b) full-f32 module semantics -> loose check (only bf16 activation cast differs)
    ref_f32 = (scale * (x2d @ w_sign.T)).reshape(2, 8, out_shape)

    assert jnp.allclose(y, ref_bf16, atol=1e-5, rtol=1e-4), "mismatch vs bf16 reference"
    assert jnp.allclose(y, ref_f32, atol=2e-4, rtol=2e-2), "mismatch vs f32 reference"

    print("KERNEL_OK")
</pallas_src>

<mosaic_0001>
module attributes {stable_mosaic.version = 11 : i64} {
  func.func @_binary_linear_kernel(%arg0: i32, %arg1: i32, %arg2: memref<1xf32, #tpu.memory_space<smem>>, %arg3: memref<16x256xf32, #tpu.memory_space<vmem>>, %arg4: memref<256x128xbf16, #tpu.memory_space<vmem>>, %arg5: memref<16x128xf32, #tpu.memory_space<vmem>>) attributes {dimension_semantics = [#tpu.dimension_semantics<parallel>, #tpu.dimension_semantics<parallel>], iteration_bounds = array<i64: 1, 1>, scalar_prefetch = 0 : i64, scratch_operands = 0 : i64, tpu.core_type = #tpu.core_type<tc>, window_params = [{transform_indices = @transform_0, window_bounds = array<i64: 1>}, {transform_indices = @transform_1, window_bounds = array<i64: 16, 256>}, {pipeline_mode = #tpu.pipeline_mode<synchronous>, transform_indices = @transform_2, window_bounds = array<i64: 256, 128>}, {transform_indices = @transform_3, window_bounds = array<i64: 16, 128>}]} {
    %c0 = arith.constant 0 : index
    %c0_0 = arith.constant 0 : index
    %0 = vector.load %arg3[%c0, %c0_0] : memref<16x256xf32, #tpu.memory_space<vmem>>, vector<16x256xf32>
    %1 = arith.truncf %0 : vector<16x256xf32> to vector<16x256xbf16>
    %c0_1 = arith.constant 0 : index
    %c0_2 = arith.constant 0 : index
    %2 = vector.load %arg4[%c0_1, %c0_2] : memref<256x128xbf16, #tpu.memory_space<vmem>>, vector<256x128xbf16>
    %cst = arith.constant dense<0.000000e+00> : vector<16x128xf32>
    %3 = tpu.matmul %1, %2, %cst {dimension_numbers = #tpu.dot_dimension_numbers<[1], [0], [0], [1], [0, 0, 1, 1], [], []>} : vector<16x256xbf16>, vector<256x128xbf16>, vector<16x128xf32> -> vector<16x128xf32>
    %c0_3 = arith.constant 0 : index
    %4 = memref.load %arg2[%c0_3] : memref<1xf32, #tpu.memory_space<smem>>
    %5 = vector.broadcast %4 : f32 to vector<16x128xf32>
    %6 = arith.mulf %3, %5 : vector<16x128xf32>
    %c0_4 = arith.constant 0 : index
    %c0_5 = arith.constant 0 : index
    %7 = vector.load %arg5[%c0_4, %c0_5] : memref<16x128xf32, #tpu.memory_space<vmem>>, vector<16x128xf32>
    tpu.vector_store %arg5[%c0_4, %c0_5], %6 {strides = array<i32>} : memref<16x128xf32, #tpu.memory_space<vmem>>, vector<16x128xf32>,
    return
  }
  func.func @transform_0(%arg0: i32, %arg1: i32) -> i32 {
    %c0_i32 = arith.constant 0 : i32
    %c0_i32_0 = arith.constant 0 : i32
    return %c0_i32 : i32
  }
  func.func @transform_1(%arg0: i32, %arg1: i32) -> (i32, i32) {
    %c0_i32 = arith.constant 0 : i32
    %c0_i32_0 = arith.constant 0 : i32
    return %arg1, %c0_i32 : i32, i32
  }
  func.func @transform_2(%arg0: i32, %arg1: i32) -> (i32, i32) {
    %c0_i32 = arith.constant 0 : i32
    %c0_i32_0 = arith.constant 0 : i32
    return %c0_i32, %arg0 : i32, i32
  }
  func.func @transform_3(%arg0: i32, %arg1: i32) -> (i32, i32) {
    %c0_i32 = arith.constant 0 : i32
    return %arg1, %arg0 : i32, i32
  }
}

module attributes {stable_mosaic.version = 11 : i64} {
  func.func @_binary_linear_kernel(%arg0: i32, %arg1: i32, %arg2: memref<1xf32, #tpu.memory_space<smem>>, %arg3: memref<16x256xf32, #tpu.memory_space<vmem>>, %arg4: memref<256x128xbf16, #tpu.memory_space<vmem>>, %arg5: memref<16x128xf32, #tpu.memory_space<vmem>>) attributes {dimension_semantics = [#tpu.dimension_semantics<parallel>, #tpu.dimension_semantics<parallel>], iteration_bounds = array<i64: 1, 1>, scalar_prefetch = 0 : i64, scratch_operands = 0 : i64, tpu.core_type = #tpu.core_type<tc>, window_params = [{transform_indices = @transform_0, window_bounds = array<i64: 1>}, {transform_indices = @transform_1, window_bounds = array<i64: 16, 256>}, {transform_indices = @transform_2, window_bounds = array<i64: 256, 128>}, {transform_indices = @transform_3, window_bounds = array<i64: 16, 128>}]} {
    %c0 = arith.constant 0 : index
    %c0_0 = arith.constant 0 : index
    %0 = vector.load %arg3[%c0, %c0_0] : memref<16x256xf32, #tpu.memory_space<vmem>>, vector<16x256xf32>
    %1 = arith.truncf %0 : vector<16x256xf32> to vector<16x256xbf16>
    %c0_1 = arith.constant 0 : index
    %c0_2 = arith.constant 0 : index
    %2 = vector.load %arg4[%c0_1, %c0_2] : memref<256x128xbf16, #tpu.memory_space<vmem>>, vector<256x128xbf16>
    %cst = arith.constant dense<0.000000e+00> : vector<16x128xf32>
    %3 = tpu.matmul %1, %2, %cst {dimension_numbers = #tpu.dot_dimension_numbers<[1], [0], [0], [1], [0, 0, 1, 1], [], []>} : vector<16x256xbf16>, vector<256x128xbf16>, vector<16x128xf32> -> vector<16x128xf32>
    %c0_3 = arith.constant 0 : index
    %4 = memref.load %arg2[%c0_3] : memref<1xf32, #tpu.memory_space<smem>>
    %5 = vector.broadcast %4 : f32 to vector<16x128xf32>
    %6 = arith.mulf %3, %5 : vector<16x128xf32>
    %c0_4 = arith.constant 0 : index
    %c0_5 = arith.constant 0 : index
    %7 = vector.load %arg5[%c0_4, %c0_5] : memref<16x128xf32, #tpu.memory_space<vmem>>, vector<16x128xf32>
    tpu.vector_store %arg5[%c0_4, %c0_5], %6 {strides = array<i32>} : memref<16x128xf32, #tpu.memory_space<vmem>>, vector<16x128xf32>,
    return
  }
  func.func @transform_0(%arg0: i32, %arg1: i32) -> i32 {
    %c0_i32 = arith.constant 0 : i32
    %c0_i32_0 = arith.constant 0 : i32
    return %c0_i32 : i32
  }
  func.func @transform_1(%arg0: i32, %arg1: i32) -> (i32, i32) {
    %c0_i32 = arith.constant 0 : i32
    %c0_i32_0 = arith.constant 0 : i32
    return %arg1, %c0_i32 : i32, i32
  }
  func.func @transform_2(%arg0: i32, %arg1: i32) -> (i32, i32) {
    %c0_i32 = arith.constant 0 : i32
    %c0_i32_0 = arith.constant 0 : i32
    return %c0_i32, %arg0 : i32, i32
  }
  func.func @transform_3(%arg0: i32, %arg1: i32) -> (i32, i32) {
    %c0_i32 = arith.constant 0 : i32
    return %arg1, %arg0 : i32, i32
  }
}

</mosaic_0001>

<llo_original>
// kernel: tpu_custom_call.1
$region0: #{tpu_custom_call.1}
  #allocation0 [shape = 'u32[]', space=smem, size = 0x4, offset = 0x4, fixed_abs, tag = 'smem constant byte address 0x4 - core index']
  #allocation1 [shape = 'u32[144,128]{1,0:T(1,128)}', space=vmem, size = 0x12000, scoped, tag = 'internal scratch']
  #allocation2 [shape = 'f32[1]{0:T(128)S(6)}', space=smem, size = 0x200, scoped, tag = 'scoped memory for tpu_custom_call.1']
  %s0 = inlined_call_operand.<no memory space> [shape: f32[1], index: 0, kind: input, shape index: {}]
  %s1 = inlined_call_operand.hbm [shape: f32[16,256], index: 1, kind: input, shape index: {}]
  %s2 = inlined_call_operand.hbm [shape: bf16[256,128], index: 2, kind: input, shape index: {}]
  %s3 = inlined_call_operand.hbm [shape: f32[16,128], index: 3, kind: output, shape index: {}]
  %s4 = sld [smem:[#allocation0]]
  $region30: #{tpu_custom_call.1} parent=0
    _
  %s6 = ssub.s32 1, %s4
  %s7 = scalar_select 0, %s6, %s4
  %8 = sst [smem:[#allocation2]] %s0
  $region1: #{tpu_custom_call.1} parent=0
    #allocation3 [shape = 'u8[16384]{0}', space=vmem, size = 0x4000, scoped, tag = 'input window, operand 1, single buffered']
    #allocation4 [shape = 's32[1]{0}', space=sflag, size = 0x4, scoped, tag = 'scoped memory for tpu_custom_call.1']
    #allocation5 [shape = 's32[1]{0}', space=sflag, size = 0x4, scoped, tag = 'scoped memory for tpu_custom_call.1']
    #allocation6 [shape = 'u8[65536]{0}', space=vmem, size = 0x10000, scoped, tag = 'input window, operand 2, single buffered']
    #allocation7 [shape = 's32[1]{0}', space=sflag, size = 0x4, scoped, tag = 'scoped memory for tpu_custom_call.1']
    #allocation8 [shape = 'u8[8192]{0}', space=vmem, size = 0x2000, scoped, tag = 'output window, operand 0, single buffered']
    %9 = vsyncpa [#allocation4], 0
    %10 = vsyncpa [#allocation7], 0
    %11 = vsyncpa [#allocation5], 0
    // Predicated region
    $region2: #{tpu_custom_call.1} parent=1 // pred_check
      _
    $region3: #{tpu_custom_call.1} parent=1 // pred_check_branch
      %13 = sbr.rel (0) target = $region5
    $region4: #{tpu_custom_call.1} parent=1 // pred_region
      _
    $region5: #{tpu_custom_call.1} parent=1 // pred_fallthru
      _
    // Predicated region
    $region6: #{tpu_custom_call.1} parent=1 // pred_check
      _
    $region7: #{tpu_custom_call.1} parent=1 // pred_check_branch
      %15 = sbr.rel (0) target = $region9
    $region8: #{tpu_custom_call.1} parent=1 // pred_region
      %s17 = ssub.s32 512, 512
      %18 = vsyncadd [#allocation4], %s17
      %s19 = sshll.u32 [#allocation3], 4
      %s20 = int_to_ptr.vmem [resolvable:$true] %s19
      %25 = dma.hbm_to_vmem [thread:$0]  %s1, 512, %s20, [#allocation4], 256, 256, 16
    $region9: #{tpu_custom_call.1} parent=1 // pred_fallthru
      _
    // Predicated region
    $region10: #{tpu_custom_call.1} parent=1 // pred_check
      _
    $region11: #{tpu_custom_call.1} parent=1 // pred_check_branch
      %27 = sbr.rel (0) target = $region13
    $region12: #{tpu_custom_call.1} parent=1 // pred_region
      %s29 = ssub.s32 2048, 2048
      %30 = vsyncadd [#allocation7], %s29
      %s31 = sshll.u32 [#allocation6], 4
      %s32 = int_to_ptr.vmem [resolvable:$true] %s31
      %37 = dma.hbm_to_vmem [thread:$0]  %s2, 2048, %s32, [#allocation7], 64, 64, 4
    $region13: #{tpu_custom_call.1} parent=1 // pred_fallthru
      _
    // Predicated region
    $region14: #{tpu_custom_call.1} parent=1 // pred_check
      _
    $region15: #{tpu_custom_call.1} parent=1 // pred_check_branch
      %39 = sbr.rel (0) target = $region17
    $region16: #{tpu_custom_call.1} parent=1 // pred_region
      %40 = dma.done [#allocation4], 512
    $region17: #{tpu_custom_call.1} parent=1 // pred_fallthru
      _
    // Predicated region
    $region18: #{tpu_custom_call.1} parent=1 // pred_check
      _
    $region19: #{tpu_custom_call.1} parent=1 // pred_check_branch
      %42 = sbr.rel (0) target = $region21
    $region20: #{tpu_custom_call.1} parent=1 // pred_region
      %43 = dma.done [#allocation7], 2048
    $region21: #{tpu_custom_call.1} parent=1 // pred_fallthru
      _
    %v45 = vld [vmem:[#allocation3] sm:$0xff]
    %v46 = vld [vmem:[#allocation3 + $0x8] sm:$0xff]
    %v47 = vld [vmem:[#allocation3 + $0x10] sm:$0xff]
    %v48 = vld [vmem:[#allocation3 + $0x18] sm:$0xff]
    %v49 = vpack.c.bf16 %v47, %v45
    %v50 = vpack.c.bf16 %v48, %v46
    %v51 = vld [vmem:[#allocation6] sm:$0xf]
    %v52 = vld [vmem:[#allocation6 + $0x4] sm:$0xf]
    %v53 = vld [vmem:[#allocation6 + $0x8] sm:$0xf]
    %v54 = vld [vmem:[#allocation6 + $0xc] sm:$0xf]
    %v55 = vld [vmem:[#allocation6 + $0x10] sm:$0xf]
    %v56 = vld [vmem:[#allocation6 + $0x14] sm:$0xf]
    %v57 = vld [vmem:[#allocation6 + $0x18] sm:$0xf]
    %v58 = vld [vmem:[#allocation6 + $0x1c] sm:$0xf]
    %v59 = vld [vmem:[#allocation6 + $0x20] sm:$0xf]
    %v60 = vld [vmem:[#allocation6 + $0x24] sm:$0xf]
    %v61 = vld [vmem:[#allocation6 + $0x28] sm:$0xf]
    %v62 = vld [vmem:[#allocation6 + $0x2c] sm:$0xf]
    %v63 = vld [vmem:[#allocation6 + $0x30] sm:$0xf]
    %v64 = vld [vmem:[#allocation6 + $0x34] sm:$0xf]
    %v65 = vld [vmem:[#allocation6 + $0x38] sm:$0xf]
    %v66 = vld [vmem:[#allocation6 + $0x3c] sm:$0xf]
    %v67 = vld [vmem:[#allocation6 + $0x40] sm:$0xf]
    %v68 = vld [vmem:[#allocation6 + $0x44] sm:$0xf]
    %v69 = vld [vmem:[#allocation6 + $0x48] sm:$0xf]
    %v70 = vld [vmem:[#allocation6 + $0x4c] sm:$0xf]
    %v71 = vld [vmem:[#allocation6 + $0x50] sm:$0xf]
    %v72 = vld [vmem:[#allocation6 + $0x54] sm:$0xf]
    %v73 = vld [vmem:[#allocation6 + $0x58] sm:$0xf]
    %v74 = vld [vmem:[#allocation6 + $0x5c] sm:$0xf]
    %v75 = vld [vmem:[#allocation6 + $0x60] sm:$0xf]
    %v76 = vld [vmem:[#allocation6 + $0x64] sm:$0xf]
    %v77 = vld [vmem:[#allocation6 + $0x68] sm:$0xf]
    %v78 = vld [vmem:[#allocation6 + $0x6c] sm:$0xf]
    %v79 = vld [vmem:[#allocation6 + $0x70] sm:$0xf]
    %v80 = vld [vmem:[#allocation6 + $0x74] sm:$0xf]
    %v81 = vld [vmem:[#allocation6 + $0x78] sm:$0xf]
    %v82 = vld [vmem:[#allocation6 + $0x7c] sm:$0xf]
    %v115 = vunpack.c.l.b16 %v51
    %v116 = vunpack.c.l.b16 %v52
    %v117 = vunpack.c.l.b16 %v53
    %v118 = vunpack.c.l.b16 %v54
    %v119 = vunpack.c.l.b16 %v55
    %v120 = vunpack.c.l.b16 %v56
    %v121 = vunpack.c.l.b16 %v57
    %v122 = vunpack.c.l.b16 %v58
    %v123 = vunpack.c.l.b16 %v59
    %v124 = vunpack.c.l.b16 %v60
    %v125 = vunpack.c.l.b16 %v61
    %v126 = vunpack.c.l.b16 %v62
    %v127 = vunpack.c.l.b16 %v63
    %v128 = vunpack.c.l.b16 %v64
    %v129 = vunpack.c.l.b16 %v65
    %v130 = vunpack.c.l.b16 %v66
    %v131 = vunpack.c.l.b16 %v67
    %v132 = vunpack.c.l.b16 %v68
    %v133 = vunpack.c.l.b16 %v69
    %v134 = vunpack.c.l.b16 %v70
    %v135 = vunpack.c.l.b16 %v71
    %v136 = vunpack.c.l.b16 %v72
    %v137 = vunpack.c.l.b16 %v73
    %v138 = vunpack.c.l.b16 %v74
    %v139 = vunpack.c.l.b16 %v75
    %v140 = vunpack.c.l.b16 %v76
    %v141 = vunpack.c.l.b16 %v77
    %v142 = vunpack.c.l.b16 %v78
    %v143 = vunpack.c.l.b16 %v79
    %v144 = vunpack.c.l.b16 %v80
    %v145 = vunpack.c.l.b16 %v81
    %v146 = vunpack.c.l.b16 %v82
    %v147 = vpack.c.b16 %v116, %v115
    %v148 = vpack.c.b16 %v118, %v117
    %v149 = vpack.c.b16 %v120, %v119
    %v150 = vpack.c.b16 %v122, %v121
    %v151 = vpack.c.b16 %v124, %v123
    %v152 = vpack.c.b16 %v126, %v125
    %v153 = vpack.c.b16 %v128, %v127
    %v154 = vpack.c.b16 %v130, %v129
    %v155 = vpack.c.b16 %v132, %v131
    %v156 = vpack.c.b16 %v134, %v133
    %v157 = vpack.c.b16 %v136, %v135
    %v158 = vpack.c.b16 %v138, %v137
    %v159 = vpack.c.b16 %v140, %v139
    %v160 = vpack.c.b16 %v142, %v141
    %v161 = vpack.c.b16 %v144, %v143
    %v162 = vpack.c.b16 %v146, %v145
    %179 = vmatprep.subr.bf16.mxu0 0
    %180 = vmatpush1.bf16.msra.mxu0 %v147
    %181 = vmatprep.subr.bf16.mxu0 0
    %182 = vmatpush1.bf16.msra.mxu0 %v148
    %183 = vmatprep.subr.bf16.mxu0 0
    %184 = vmatpush1.bf16.msra.mxu0 %v149
    %185 = vmatprep.subr.bf16.mxu0 0
    %186 = vmatpush1.bf16.msra.mxu0 %v150
    %187 = vmatprep.subr.bf16.mxu0 0
    %188 = vmatpush1.bf16.msra.mxu0 %v151
    %189 = vmatprep.subr.bf16.mxu0 0
    %190 = vmatpush1.bf16.msra.mxu0 %v152
    %191 = vmatprep.subr.bf16.mxu0 0
    %192 = vmatpush1.bf16.msra.mxu0 %v153
    %193 = vmatprep.subr.bf16.mxu0 0
    %194 = vmatpush1.bf16.msra.mxu0 %v154
    %195 = vmatprep.subr.bf16.mxu0 0
    %196 = vmatpush1.bf16.msra.mxu0 %v155
    %197 = vmatprep.subr.bf16.mxu0 0
    %198 = vmatpush1.bf16.msra.mxu0 %v156
    %199 = vmatprep.subr.bf16.mxu0 0
    %200 = vmatpush1.bf16.msra.mxu0 %v157
    %201 = vmatprep.subr.bf16.mxu0 0
    %202 = vmatpush1.bf16.msra.mxu0 %v158
    %203 = vmatprep.subr.bf16.mxu0 0
    %204 = vmatpush1.bf16.msra.mxu0 %v159
    %205 = vmatprep.subr.bf16.mxu0 0
    %206 = vmatpush1.bf16.msra.mxu0 %v160
    %207 = vmatprep.subr.bf16.mxu0 0
    %208 = vmatpush1.bf16.msra.mxu0 %v161
    %209 = vmatprep.subr.bf16.mxu0 0
    %210 = vmatpush1.bf16.msra.mxu0 %v162
    %211 = vmatprep.mubr.bf16.mxu0 %v50
    %212 = vmatmul.mubr.bf16.gmra.mrb[0].mxu0 %v49
    %v213 = vpop.f32.mrb[0].mxu0
    %v214 = vadd.f32 0.0, %v213
    %v215 = vpop.f32.mrb[0].mxu0
    %v216 = vpop.f32.mrb[0].mxu0
    %v217 = vadd.f32 0.0, %v216
    %v218 = vpop.f32.mrb[0].mxu0
    %219 = vdwg.mxu0
    %s220 = sld [smem:[#allocation2]]
    %v221 = vstv %s220
    %v222 = vmul.f32 %v214, %v221
    %v223 = vmul.f32 %v217, %v221
    %224 = vst [vmem:[#allocation8] sm:$0xff] %v222
    %225 = vst [vmem:[#allocation8 + $0x8] sm:$0xff] %v223
    // Predicated region
    $region22: #{tpu_custom_call.1} parent=1 // pred_check
      _
    $region23: #{tpu_custom_call.1} parent=1 // pred_check_branch
      %227 = sbr.rel (0) target = $region25
    $region24: #{tpu_custom_call.1} parent=1 // pred_region
      %s229 = ssub.s32 256, 256
      %230 = vsyncadd [#allocation5], %s229
      %s231 = sshll.u32 [#allocation8], 4
      %s232 = int_to_ptr.vmem [resolvable:$true] %s231
      %237 = dma.vmem_to_hbm [thread:$0]  %s232, 256, %s3, [#allocation5], 128, 128, 8
    $region25: #{tpu_custom_call.1} parent=1 // pred_fallthru
      _
    // Predicated region
    $region26: #{tpu_custom_call.1} parent=1 // pred_check
      _
    $region27: #{tpu_custom_call.1} parent=1 // pred_check_branch
      %239 = sbr.rel (0) target = $region29
    $region28: #{tpu_custom_call.1} parent=1 // pred_region
      %240 = dma.done [#allocation5], 256
    $region29: #{tpu_custom_call.1} parent=1 // pred_fallthru
      _
    %241 = vsyncpa [#allocation4], 1
    %242 = vsyncpa [#allocation7], 1
    %243 = vsyncpa [#allocation5], 1

// kernel: tpu_custom_call.1
$region0: #{tpu_custom_call.1}
  #allocation0 [shape = 'u32[]', space=smem, size = 0x4, offset = 0x4, fixed_abs, tag = 'smem constant byte address 0x4 - core index']
  #allocation1 [shape = 'u32[144,128]{1,0:T(1,128)}', space=vmem, size = 0x12000, scoped, tag = 'internal scratch']
  #allocation2 [shape = 'f32[1]{0:T(128)S(6)}', space=smem, size = 0x200, scoped, tag = 'scoped memory for tpu_custom_call.1']
  %s0 = inlined_call_operand.<no memory space> [shape: f32[1], index: 0, kind: input, shape index: {}]
  %s1 = inlined_call_operand.hbm [shape: f32[16,256], index: 1, kind: input, shape index: {}]
  %s2 = inlined_call_operand.hbm [shape: bf16[256,128], index: 2, kind: input, shape index: {}]
  %s3 = inlined_call_operand.hbm [shape: f32[16,128], index: 3, kind: output, shape index: {}]
  %s4 = sld [smem:[#allocation0]]
  $region30: #{tpu_custom_call.1} parent=0
    _
  %s6 = ssub.s32 1, %s4
  %s7 = scalar_select 0, %s6, %s4
  %8 = sst [smem:[#allocation2]] %s0
  $region1: #{tpu_custom_call.1} parent=0
    #allocation3 [shape = 'u8[16384]{0}', space=vmem, size = 0x4000, scoped, tag = 'input window, operand 1, single buffered']
    #allocation4 [shape = 's32[1]{0}', space=sflag, size = 0x4, scoped, tag = 'scoped memory for tpu_custom_call.1']
    #allocation5 [shape = 's32[1]{0}', space=sflag, size = 0x4, scoped, tag = 'scoped memory for tpu_custom_call.1']
    #allocation6 [shape = 'u8[65536]{0}', space=vmem, size = 0x10000, scoped, tag = 'input window, operand 2, single buffered']
    #allocation7 [shape = 's32[1]{0}', space=sflag, size = 0x4, scoped, tag = 'scoped memory for tpu_custom_call.1']
    #allocation8 [shape = 'u8[8192]{0}', space=vmem, size = 0x2000, scoped, tag = 'output window, operand 0, single buffered']
    %9 = vsyncpa [#allocation4], 0
    %10 = vsyncpa [#allocation7], 0
    %11 = vsyncpa [#allocation5], 0
    // Predicated region
    $region2: #{tpu_custom_call.1} parent=1 // pred_check
      _
    $region3: #{tpu_custom_call.1} parent=1 // pred_check_branch
      %13 = sbr.rel (0) target = $region5
    $region4: #{tpu_custom_call.1} parent=1 // pred_region
      _
    $region5: #{tpu_custom_call.1} parent=1 // pred_fallthru
      _
    // Predicated region
    $region6: #{tpu_custom_call.1} parent=1 // pred_check
      _
    $region7: #{tpu_custom_call.1} parent=1 // pred_check_branch
      %15 = sbr.rel (0) target = $region9
    $region8: #{tpu_custom_call.1} parent=1 // pred_region
      %s17 = ssub.s32 512, 512
      %18 = vsyncadd [#allocation4], %s17
      %s19 = sshll.u32 [#allocation3], 4
      %s20 = int_to_ptr.vmem [resolvable:$true] %s19
      %25 = dma.hbm_to_vmem [thread:$0]  %s1, 512, %s20, [#allocation4], 256, 256, 16
    $region9: #{tpu_custom_call.1} parent=1 // pred_fallthru
      _
    // Predicated region
    $region10: #{tpu_custom_call.1} parent=1 // pred_check
      _
    $region11: #{tpu_custom_call.1} parent=1 // pred_check_branch
      %27 = sbr.rel (0) target = $region13
    $region12: #{tpu_custom_call.1} parent=1 // pred_region
      %s29 = ssub.s32 2048, 2048
      %30 = vsyncadd [#allocation7], %s29
      %s31 = sshll.u32 [#allocation6], 4
      %s32 = int_to_ptr.vmem [resolvable:$true] %s31
      %37 = dma.hbm_to_vmem [thread:$0]  %s2, 2048, %s32, [#allocation7], 64, 64, 4
    $region13: #{tpu_custom_call.1} parent=1 // pred_fallthru
      _
    // Predicated region
    $region14: #{tpu_custom_call.1} parent=1 // pred_check
      _
    $region15: #{tpu_custom_call.1} parent=1 // pred_check_branch
      %39 = sbr.rel (0) target = $region17
    $region16: #{tpu_custom_call.1} parent=1 // pred_region
      %40 = dma.done [#allocation4], 512
    $region17: #{tpu_custom_call.1} parent=1 // pred_fallthru
      _
    // Predicated region
    $region18: #{tpu_custom_call.1} parent=1 // pred_check
      _
    $region19: #{tpu_custom_call.1} parent=1 // pred_check_branch
      %42 = sbr.rel (0) target = $region21
    $region20: #{tpu_custom_call.1} parent=1 // pred_region
      %43 = dma.done [#allocation7], 2048
    $region21: #{tpu_custom_call.1} parent=1 // pred_fallthru
      _
    %v45 = vld [vmem:[#allocation3] sm:$0xff]
    %v46 = vld [vmem:[#allocation3 + $0x8] sm:$0xff]
    %v47 = vld [vmem:[#allocation3 + $0x10] sm:$0xff]
    %v48 = vld [vmem:[#allocation3 + $0x18] sm:$0xff]
    %v49 = vpack.c.bf16 %v47, %v45
    %v50 = vpack.c.bf16 %v48, %v46
    %v51 = vld [vmem:[#allocation6] sm:$0xf]
    %v52 = vld [vmem:[#allocation6 + $0x4] sm:$0xf]
    %v53 = vld [vmem:[#allocation6 + $0x8] sm:$0xf]
    %v54 = vld [vmem:[#allocation6 + $0xc] sm:$0xf]
    %v55 = vld [vmem:[#allocation6 + $0x10] sm:$0xf]
    %v56 = vld [vmem:[#allocation6 + $0x14] sm:$0xf]
    %v57 = vld [vmem:[#allocation6 + $0x18] sm:$0xf]
    %v58 = vld [vmem:[#allocation6 + $0x1c] sm:$0xf]
    %v59 = vld [vmem:[#allocation6 + $0x20] sm:$0xf]
    %v60 = vld [vmem:[#allocation6 + $0x24] sm:$0xf]
    %v61 = vld [vmem:[#allocation6 + $0x28] sm:$0xf]
    %v62 = vld [vmem:[#allocation6 + $0x2c] sm:$0xf]
    %v63 = vld [vmem:[#allocation6 + $0x30] sm:$0xf]
    %v64 = vld [vmem:[#allocation6 + $0x34] sm:$0xf]
    %v65 = vld [vmem:[#allocation6 + $0x38] sm:$0xf]
    %v66 = vld [vmem:[#allocation6 + $0x3c] sm:$0xf]
    %v67 = vld [vmem:[#allocation6 + $0x40] sm:$0xf]
    %v68 = vld [vmem:[#allocation6 + $0x44] sm:$0xf]
    %v69 = vld [vmem:[#allocation6 + $0x48] sm:$0xf]
    %v70 = vld [vmem:[#allocation6 + $0x4c] sm:$0xf]
    %v71 = vld [vmem:[#allocation6 + $0x50] sm:$0xf]
    %v72 = vld [vmem:[#allocation6 + $0x54] sm:$0xf]
    %v73 = vld [vmem:[#allocation6 + $0x58] sm:$0xf]
    %v74 = vld [vmem:[#allocation6 + $0x5c] sm:$0xf]
    %v75 = vld [vmem:[#allocation6 + $0x60] sm:$0xf]
    %v76 = vld [vmem:[#allocation6 + $0x64] sm:$0xf]
    %v77 = vld [vmem:[#allocation6 + $0x68] sm:$0xf]
    %v78 = vld [vmem:[#allocation6 + $0x6c] sm:$0xf]
    %v79 = vld [vmem:[#allocation6 + $0x70] sm:$0xf]
    %v80 = vld [vmem:[#allocation6 + $0x74] sm:$0xf]
    %v81 = vld [vmem:[#allocation6 + $0x78] sm:$0xf]
    %v82 = vld [vmem:[#allocation6 + $0x7c] sm:$0xf]
    %v115 = vunpack.c.l.b16 %v51
    %v116 = vunpack.c.l.b16 %v52
    %v117 = vunpack.c.l.b16 %v53
    %v118 = vunpack.c.l.b16 %v54
    %v119 = vunpack.c.l.b16 %v55
    %v120 = vunpack.c.l.b16 %v56
    %v121 = vunpack.c.l.b16 %v57
    %v122 = vunpack.c.l.b16 %v58
    %v123 = vunpack.c.l.b16 %v59
    %v124 = vunpack.c.l.b16 %v60
    %v125 = vunpack.c.l.b16 %v61
    %v126 = vunpack.c.l.b16 %v62
    %v127 = vunpack.c.l.b16 %v63
    %v128 = vunpack.c.l.b16 %v64
    %v129 = vunpack.c.l.b16 %v65
    %v130 = vunpack.c.l.b16 %v66
    %v131 = vunpack.c.l.b16 %v67
    %v132 = vunpack.c.l.b16 %v68
    %v133 = vunpack.c.l.b16 %v69
    %v134 = vunpack.c.l.b16 %v70
    %v135 = vunpack.c.l.b16 %v71
    %v136 = vunpack.c.l.b16 %v72
    %v137 = vunpack.c.l.b16 %v73
    %v138 = vunpack.c.l.b16 %v74
    %v139 = vunpack.c.l.b16 %v75
    %v140 = vunpack.c.l.b16 %v76
    %v141 = vunpack.c.l.b16 %v77
    %v142 = vunpack.c.l.b16 %v78
    %v143 = vunpack.c.l.b16 %v79
    %v144 = vunpack.c.l.b16 %v80
    %v145 = vunpack.c.l.b16 %v81
    %v146 = vunpack.c.l.b16 %v82
    %v147 = vpack.c.b16 %v116, %v115
    %v148 = vpack.c.b16 %v118, %v117
    %v149 = vpack.c.b16 %v120, %v119
    %v150 = vpack.c.b16 %v122, %v121
    %v151 = vpack.c.b16 %v124, %v123
    %v152 = vpack.c.b16 %v126, %v125
    %v153 = vpack.c.b16 %v128, %v127
    %v154 = vpack.c.b16 %v130, %v129
    %v155 = vpack.c.b16 %v132, %v131
    %v156 = vpack.c.b16 %v134, %v133
    %v157 = vpack.c.b16 %v136, %v135
    %v158 = vpack.c.b16 %v138, %v137
    %v159 = vpack.c.b16 %v140, %v139
    %v160 = vpack.c.b16 %v142, %v141
    %v161 = vpack.c.b16 %v144, %v143
    %v162 = vpack.c.b16 %v146, %v145
    %179 = vmatprep.subr.bf16.mxu0 0
    %180 = vmatpush1.bf16.msra.mxu0 %v147
    %181 = vmatprep.subr.bf16.mxu0 0
    %182 = vmatpush1.bf16.msra.mxu0 %v148
    %183 = vmatprep.subr.bf16.mxu0 0
    %184 = vmatpush1.bf16.msra.mxu0 %v149
    %185 = vmatprep.subr.bf16.mxu0 0
    %186 = vmatpush1.bf16.msra.mxu0 %v150
    %187 = vmatprep.subr.bf16.mxu0 0
    %188 = vmatpush1.bf16.msra.mxu0 %v151
    %189 = vmatprep.subr.bf16.mxu0 0
    %190 = vmatpush1.bf16.msra.mxu0 %v152
    %191 = vmatprep.subr.bf16.mxu0 0
    %192 = vmatpush1.bf16.msra.mxu0 %v153
    %193 = vmatprep.subr.bf16.mxu0 0
    %194 = vmatpush1.bf16.msra.mxu0 %v154
    %195 = vmatprep.subr.bf16.mxu0 0
    %196 = vmatpush1.bf16.msra.mxu0 %v155
    %197 = vmatprep.subr.bf16.mxu0 0
    %198 = vmatpush1.bf16.msra.mxu0 %v156
    %199 = vmatprep.subr.bf16.mxu0 0
    %200 = vmatpush1.bf16.msra.mxu0 %v157
    %201 = vmatprep.subr.bf16.mxu0 0
    %202 = vmatpush1.bf16.msra.mxu0 %v158
    %203 = vmatprep.subr.bf16.mxu0 0
    %204 = vmatpush1.bf16.msra.mxu0 %v159
    %205 = vmatprep.subr.bf16.mxu0 0
    %206 = vmatpush1.bf16.msra.mxu0 %v160
    %207 = vmatprep.subr.bf16.mxu0 0
    %208 = vmatpush1.bf16.msra.mxu0 %v161
    %209 = vmatprep.subr.bf16.mxu0 0
    %210 = vmatpush1.bf16.msra.mxu0 %v162
    %211 = vmatprep.mubr.bf16.mxu0 %v50
    %212 = vmatmul.mubr.bf16.gmra.mrb[0].mxu0 %v49
    %v213 = vpop.f32.mrb[0].mxu0
    %v214 = vadd.f32 0.0, %v213
    %v215 = vpop.f32.mrb[0].mxu0
    %v216 = vpop.f32.mrb[0].mxu0
    %v217 = vadd.f32 0.0, %v216
    %v218 = vpop.f32.mrb[0].mxu0
    %219 = vdwg.mxu0
    %s220 = sld [smem:[#allocation2]]
    %v221 = vstv %s220
    %v222 = vmul.f32 %v214, %v221
    %v223 = vmul.f32 %v217, %v221
    %224 = vst [vmem:[#allocation8] sm:$0xff] %v222
    %225 = vst [vmem:[#allocation8 + $0x8] sm:$0xff] %v223
    // Predicated region
    $region22: #{tpu_custom_call.1} parent=1 // pred_check
      _
    $region23: #{tpu_custom_call.1} parent=1 // pred_check_branch
      %227 = sbr.rel (0) target = $region25
    $region24: #{tpu_custom_call.1} parent=1 // pred_region
      %s229 = ssub.s32 256, 256
      %230 = vsyncadd [#allocation5], %s229
      %s231 = sshll.u32 [#allocation8], 4
      %s232 = int_to_ptr.vmem [resolvable:$true] %s231
      %237 = dma.vmem_to_hbm [thread:$0]  %s232, 256, %s3, [#allocation5], 128, 128, 8
    $region25: #{tpu_custom_call.1} parent=1 // pred_fallthru
      _
    // Predicated region
    $region26: #{tpu_custom_call.1} parent=1 // pred_check
      _
    $region27: #{tpu_custom_call.1} parent=1 // pred_check_branch
      %239 = sbr.rel (0) target = $region29
    $region28: #{tpu_custom_call.1} parent=1 // pred_region
      %240 = dma.done [#allocation5], 256
    $region29: #{tpu_custom_call.1} parent=1 // pred_fallthru
      _
    %241 = vsyncpa [#allocation4], 1
    %242 = vsyncpa [#allocation7], 1
    %243 = vsyncpa [#allocation5], 1

</llo_original>
